<compile_context>
chip_gen: v6e
topology: v6e:2x2x1
jax: 0.10.0
libtpu: 0.0.40
codegen_flags: <defaults>
</compile_context>

<pallas_src>
import jax
import jax.numpy as jnp
from jax.experimental import pallas as pl
from jax.experimental.pallas import tpu as pltpu


def _rnn_model_kernel(tok_ref, h0_ref, wih_ref, bih_ref, whh_ref, bhh_ref,
                      wout_ref, bout_ref, out_ref, hT_ref, y_ref):
    TB = y_ref.shape[0]          # T * B (time-major flattened rows)
    B, H = h0_ref.shape
    V = wih_ref.shape[0]
    T = TB // B

    # ---- One-hot encode all (T*B) tokens and project with ONE tall GEMM. ----
    tok = tok_ref[...]                                          # (TB, 1) int32
    lane_ids = jax.lax.broadcasted_iota(jnp.int32, (TB, V), 1)  # (TB, V)
    onehot = (lane_ids == tok).astype(jnp.float32)              # (TB, V)

    # Both RNN biases are added inside the same tanh -> fuse them once and fold
    # into the input-projection GEMM epilogue (removes T redundant bias adds).
    bias = bih_ref[...] + bhh_ref[...]                          # (1, H)
    xproj = (jnp.dot(onehot, wih_ref[...],
                     preferred_element_type=jnp.float32)
             + bias)                                            # (TB, H)

    # ---- Sequential recurrence over time (statically unrolled, T is small). ----
    h = h0_ref[...]                                             # (B, H)
    whh = whh_ref[...]                                          # (H, H)
    for t in range(T):
        x_t = xproj[t * B:(t + 1) * B, :]                       # static, aligned slice
        h = jnp.tanh(x_t
                     + jnp.dot(h, whh, preferred_element_type=jnp.float32))
        y_ref[pl.ds(t * B, B), :] = h                           # accumulate Y rows

    # ---- Output projection: ONE tall GEMM, lane-dense (V = 128) store. ----
    out_ref[...] = (jnp.dot(y_ref[...], wout_ref[...],
                            preferred_element_type=jnp.float32)
                    + bout_ref[...]).astype(out_ref.dtype)
    hT_ref[...] = h.astype(hT_ref.dtype)


def rnn_model_forward(inputs, state, w_ih_t, b_ih, w_hh_t, b_hh, w_out_t, b_out):
    """inputs (B, T) int tokens, state (1, B, H) f32.
    w_ih_t (V, H), w_hh_t (H, H), w_out_t (H, V) are the PyTorch weights transposed;
    biases b_ih/b_hh (1, H), b_out (1, V).
    Returns (output (T*B, V), state (1, B, H)) matching RNNModel.forward."""
    B, T = inputs.shape
    V, H = w_ih_t.shape
    TB = T * B

    # Time-major flatten (matches inputs.T then row index t*B + b).
    tok = jnp.transpose(inputs).reshape(TB, 1).astype(jnp.int32)
    h0 = state[0]                                               # (B, H)

    grid_spec = pltpu.PrefetchScalarGridSpec(
        num_scalar_prefetch=0,
        grid=(1,),
        in_specs=[
            pl.BlockSpec((TB, 1), lambda i: (0, 0)),   # tokens
            pl.BlockSpec((B, H), lambda i: (0, 0)),    # h0
            pl.BlockSpec((V, H), lambda i: (0, 0)),    # W_ih^T
            pl.BlockSpec((1, H), lambda i: (0, 0)),    # b_ih
            pl.BlockSpec((H, H), lambda i: (0, 0)),    # W_hh^T
            pl.BlockSpec((1, H), lambda i: (0, 0)),    # b_hh
            pl.BlockSpec((H, V), lambda i: (0, 0)),    # W_out^T
            pl.BlockSpec((1, V), lambda i: (0, 0)),    # b_out
        ],
        out_specs=[
            pl.BlockSpec((TB, V), lambda i: (0, 0)),   # logits (lane-dense)
            pl.BlockSpec((B, H), lambda i: (0, 0)),    # final hidden state
        ],
        scratch_shapes=[
            pltpu.VMEM((TB, H), jnp.float32),          # Y accumulator
        ],
    )

    out, hT = pl.pallas_call(
        _rnn_model_kernel,
        out_shape=(jax.ShapeDtypeStruct((TB, V), jnp.float32),
                   jax.ShapeDtypeStruct((B, H), jnp.float32)),
        grid_spec=grid_spec,
        compiler_params=pltpu.CompilerParams(
            dimension_semantics=("arbitrary",)),
    )(tok, h0, w_ih_t, b_ih, w_hh_t, b_hh, w_out_t, b_out)

    return out, hT[None]                                        # state: (1, B, H)


def _reference(inputs, state, w_ih_t, b_ih, w_hh_t, b_hh, w_out_t, b_out):
    """Pure-JAX reference mirroring the PyTorch RNNModel forward (tanh nn.RNN)."""
    V = w_ih_t.shape[0]
    X = jax.nn.one_hot(inputs.T, V, dtype=jnp.float32)          # (T, B, V)

    def step(h, x_t):
        h_new = jnp.tanh(x_t @ w_ih_t + b_ih + h @ w_hh_t + b_hh)
        return h_new, h_new

    hT, Y = jax.lax.scan(step, state[0], X)                     # Y: (T, B, H)
    out = Y.reshape(-1, Y.shape[-1]) @ w_out_t + b_out          # (T*B, V)
    return out, hT[None]


if __name__ == "__main__":
    # Small shapes consistent with the module's forward pass.
    batch_size, num_steps = 8, 8
    vocab_size, num_hiddens = 128, 32

    key = jax.random.PRNGKey(0)
    k_tok, k_wih, k_bih, k_whh, k_bhh, k_wout, k_bout = jax.random.split(key, 7)

    inputs = jax.random.randint(k_tok, (batch_size, num_steps), 0, vocab_size,
                                dtype=jnp.int32)

    # Deterministic params, scale ~ 1/sqrt(hidden) like PyTorch RNN/Linear init.
    bound = 1.0 / float(jnp.sqrt(jnp.float32(num_hiddens)))
    w_ih_t = jax.random.uniform(k_wih, (vocab_size, num_hiddens), jnp.float32,
                                -1.0, 1.0) * bound
    b_ih = jax.random.uniform(k_bih, (1, num_hiddens), jnp.float32,
                              -1.0, 1.0) * bound
    w_hh_t = jax.random.uniform(k_whh, (num_hiddens, num_hiddens), jnp.float32,
                                -1.0, 1.0) * bound
    b_hh = jax.random.uniform(k_bhh, (1, num_hiddens), jnp.float32,
                              -1.0, 1.0) * bound
    w_out_t = jax.random.uniform(k_wout, (num_hiddens, vocab_size), jnp.float32,
                                 -1.0, 1.0) * bound
    b_out = jax.random.uniform(k_bout, (1, vocab_size), jnp.float32,
                               -1.0, 1.0) * bound

    # begin_state(): zeros of shape (num_directions * num_layers, B, H) = (1, B, H).
    state0 = jnp.zeros((1, batch_size, num_hiddens), jnp.float32)

    out, state = rnn_model_forward(inputs, state0, w_ih_t, b_ih,
                                   w_hh_t, b_hh, w_out_t, b_out)
    out = jax.block_until_ready(out)
    state = jax.block_until_ready(state)

    ref_out, ref_state = _reference(inputs, state0, w_ih_t, b_ih,
                                    w_hh_t, b_hh, w_out_t, b_out)

    assert out.shape == (num_steps * batch_size, vocab_size)
    assert state.shape == (1, batch_size, num_hiddens)
    assert jnp.allclose(out, ref_out, atol=1e-4, rtol=1e-4), "output mismatch vs reference"
    assert jnp.allclose(state, ref_state, atol=1e-4, rtol=1e-4), "state mismatch vs reference"

    print("KERNEL_OK")
</pallas_src>

<mosaic_0001>
module attributes {stable_mosaic.version = 11 : i64} {
  func.func @_rnn_model_kernel(%arg0: i32, %arg1: memref<64x1xi32, #tpu.memory_space<vmem>>, %arg2: memref<8x32xf32, #tpu.memory_space<vmem>>, %arg3: memref<128x32xf32, #tpu.memory_space<vmem>>, %arg4: memref<1x32xf32, #tpu.memory_space<vmem>>, %arg5: memref<32x32xf32, #tpu.memory_space<vmem>>, %arg6: memref<1x32xf32, #tpu.memory_space<vmem>>, %arg7: memref<32x128xf32, #tpu.memory_space<vmem>>, %arg8: memref<1x128xf32, #tpu.memory_space<vmem>>, %arg9: memref<64x128xf32, #tpu.memory_space<vmem>>, %arg10: memref<8x32xf32, #tpu.memory_space<vmem>>, %arg11: memref<64x32xf32, #tpu.memory_space<vmem>>) attributes {dimension_semantics = [#tpu.dimension_semantics<arbitrary>], iteration_bounds = array<i64: 1>, scalar_prefetch = 0 : i64, scratch_operands = 1 : i64, tpu.core_type = #tpu.core_type<tc>, window_params = [{pipeline_mode = #tpu.pipeline_mode<synchronous>, transform_indices = @transform_0, window_bounds = array<i64: 64, 1>}, {pipeline_mode = #tpu.pipeline_mode<synchronous>, transform_indices = @transform_1, window_bounds = array<i64: 8, 32>}, {pipeline_mode = #tpu.pipeline_mode<synchronous>, transform_indices = @transform_2, window_bounds = array<i64: 128, 32>}, {pipeline_mode = #tpu.pipeline_mode<synchronous>, transform_indices = @transform_3, window_bounds = array<i64: 1, 32>}, {pipeline_mode = #tpu.pipeline_mode<synchronous>, transform_indices = @transform_4, window_bounds = array<i64: 32, 32>}, {pipeline_mode = #tpu.pipeline_mode<synchronous>, transform_indices = @transform_5, window_bounds = array<i64: 1, 32>}, {pipeline_mode = #tpu.pipeline_mode<synchronous>, transform_indices = @transform_6, window_bounds = array<i64: 32, 128>}, {pipeline_mode = #tpu.pipeline_mode<synchronous>, transform_indices = @transform_7, window_bounds = array<i64: 1, 128>}, {pipeline_mode = #tpu.pipeline_mode<synchronous>, transform_indices = @transform_8, window_bounds = array<i64: 64, 128>}, {pipeline_mode = #tpu.pipeline_mode<synchronous>, transform_indices = @transform_9, window_bounds = array<i64: 8, 32>}]} {
    %c0 = arith.constant 0 : index
    %c0_0 = arith.constant 0 : index
    %0 = vector.load %arg1[%c0, %c0_0] : memref<64x1xi32, #tpu.memory_space<vmem>>, vector<64x1xi32>
    %1 = tpu.iota {dimensions = array<i32: 1>} : vector<64x128xi32>
    %2 = vector.broadcast %0 : vector<64x1xi32> to vector<64x128xi32>
    %3 = arith.cmpi eq, %1, %2 : vector<64x128xi32>
    %4 = arith.extui %3 : vector<64x128xi1> to vector<64x128xi32>
    %5 = arith.sitofp %4 : vector<64x128xi32> to vector<64x128xf32>
    %c0_1 = arith.constant 0 : index
    %c0_2 = arith.constant 0 : index
    %6 = vector.load %arg4[%c0_1, %c0_2] : memref<1x32xf32, #tpu.memory_space<vmem>>, vector<1x32xf32>
    %c0_3 = arith.constant 0 : index
    %c0_4 = arith.constant 0 : index
    %7 = vector.load %arg6[%c0_3, %c0_4] : memref<1x32xf32, #tpu.memory_space<vmem>>, vector<1x32xf32>
    %8 = arith.addf %6, %7 : vector<1x32xf32>
    %c0_5 = arith.constant 0 : index
    %c0_6 = arith.constant 0 : index
    %9 = vector.load %arg3[%c0_5, %c0_6] : memref<128x32xf32, #tpu.memory_space<vmem>>, vector<128x32xf32>
    %cst = arith.constant dense<0.000000e+00> : vector<64x32xf32>
    %10 = tpu.matmul %5, %9, %cst {dimension_numbers = #tpu.dot_dimension_numbers<[1], [0], [0], [1], [0, 0, 1, 1], [], []>} : vector<64x128xf32>, vector<128x32xf32>, vector<64x32xf32> -> vector<64x32xf32>
    %11 = vector.broadcast %8 : vector<1x32xf32> to vector<64x32xf32>
    %12 = arith.addf %10, %11 : vector<64x32xf32>
    %c0_7 = arith.constant 0 : index
    %c0_8 = arith.constant 0 : index
    %13 = vector.load %arg2[%c0_7, %c0_8] : memref<8x32xf32, #tpu.memory_space<vmem>>, vector<8x32xf32>
    %c0_9 = arith.constant 0 : index
    %c0_10 = arith.constant 0 : index
    %14 = vector.load %arg5[%c0_9, %c0_10] : memref<32x32xf32, #tpu.memory_space<vmem>>, vector<32x32xf32>
    %15 = vector.extract_strided_slice %12 {offsets = [0, 0], sizes = [8, 32], strides = [1, 1]} : vector<64x32xf32> to vector<8x32xf32>
    %cst_11 = arith.constant dense<0.000000e+00> : vector<8x32xf32>
    %16 = tpu.matmul %13, %14, %cst_11 {dimension_numbers = #tpu.dot_dimension_numbers<[1], [0], [0], [1], [0, 0, 1, 1], [], []>} : vector<8x32xf32>, vector<32x32xf32>, vector<8x32xf32> -> vector<8x32xf32>
    %17 = arith.addf %15, %16 : vector<8x32xf32>
    %18 = math.tanh %17 : vector<8x32xf32>
    %c0_12 = arith.constant 0 : index
    %c0_13 = arith.constant 0 : index
    %19 = vector.load %arg11[%c0_12, %c0_13] : memref<64x32xf32, #tpu.memory_space<vmem>>, vector<8x32xf32>
    tpu.vector_store %arg11[%c0_12, %c0_13], %18 {strides = array<i32>} : memref<64x32xf32, #tpu.memory_space<vmem>>, vector<8x32xf32>,
    %20 = vector.extract_strided_slice %12 {offsets = [8, 0], sizes = [8, 32], strides = [1, 1]} : vector<64x32xf32> to vector<8x32xf32>
    %cst_14 = arith.constant dense<0.000000e+00> : vector<8x32xf32>
    %21 = tpu.matmul %18, %14, %cst_14 {dimension_numbers = #tpu.dot_dimension_numbers<[1], [0], [0], [1], [0, 0, 1, 1], [], []>} : vector<8x32xf32>, vector<32x32xf32>, vector<8x32xf32> -> vector<8x32xf32>
    %22 = arith.addf %20, %21 : vector<8x32xf32>
    %23 = math.tanh %22 : vector<8x32xf32>
    %c8 = arith.constant 8 : index
    %c0_15 = arith.constant 0 : index
    %24 = vector.load %arg11[%c8, %c0_15] : memref<64x32xf32, #tpu.memory_space<vmem>>, vector<8x32xf32>
    tpu.vector_store %arg11[%c8, %c0_15], %23 {strides = array<i32>} : memref<64x32xf32, #tpu.memory_space<vmem>>, vector<8x32xf32>,
    %25 = vector.extract_strided_slice %12 {offsets = [16, 0], sizes = [8, 32], strides = [1, 1]} : vector<64x32xf32> to vector<8x32xf32>
    %cst_16 = arith.constant dense<0.000000e+00> : vector<8x32xf32>
    %26 = tpu.matmul %23, %14, %cst_16 {dimension_numbers = #tpu.dot_dimension_numbers<[1], [0], [0], [1], [0, 0, 1, 1], [], []>} : vector<8x32xf32>, vector<32x32xf32>, vector<8x32xf32> -> vector<8x32xf32>
    %27 = arith.addf %25, %26 : vector<8x32xf32>
    %28 = math.tanh %27 : vector<8x32xf32>
    %c16 = arith.constant 16 : index
    %c0_17 = arith.constant 0 : index
    %29 = vector.load %arg11[%c16, %c0_17] : memref<64x32xf32, #tpu.memory_space<vmem>>, vector<8x32xf32>
    tpu.vector_store %arg11[%c16, %c0_17], %28 {strides = array<i32>} : memref<64x32xf32, #tpu.memory_space<vmem>>, vector<8x32xf32>,
    %30 = vector.extract_strided_slice %12 {offsets = [24, 0], sizes = [8, 32], strides = [1, 1]} : vector<64x32xf32> to vector<8x32xf32>
    %cst_18 = arith.constant dense<0.000000e+00> : vector<8x32xf32>
    %31 = tpu.matmul %28, %14, %cst_18 {dimension_numbers = #tpu.dot_dimension_numbers<[1], [0], [0], [1], [0, 0, 1, 1], [], []>} : vector<8x32xf32>, vector<32x32xf32>, vector<8x32xf32> -> vector<8x32xf32>
    %32 = arith.addf %30, %31 : vector<8x32xf32>
    %33 = math.tanh %32 : vector<8x32xf32>
    %c24 = arith.constant 24 : index
    %c0_19 = arith.constant 0 : index
    %34 = vector.load %arg11[%c24, %c0_19] : memref<64x32xf32, #tpu.memory_space<vmem>>, vector<8x32xf32>
    tpu.vector_store %arg11[%c24, %c0_19], %33 {strides = array<i32>} : memref<64x32xf32, #tpu.memory_space<vmem>>, vector<8x32xf32>,
    %35 = vector.extract_strided_slice %12 {offsets = [32, 0], sizes = [8, 32], strides = [1, 1]} : vector<64x32xf32> to vector<8x32xf32>
    %cst_20 = arith.constant dense<0.000000e+00> : vector<8x32xf32>
    %36 = tpu.matmul %33, %14, %cst_20 {dimension_numbers = #tpu.dot_dimension_numbers<[1], [0], [0], [1], [0, 0, 1, 1], [], []>} : vector<8x32xf32>, vector<32x32xf32>, vector<8x32xf32> -> vector<8x32xf32>
    %37 = arith.addf %35, %36 : vector<8x32xf32>
    %38 = math.tanh %37 : vector<8x32xf32>
    %c32 = arith.constant 32 : index
    %c0_21 = arith.constant 0 : index
    %39 = vector.load %arg11[%c32, %c0_21] : memref<64x32xf32, #tpu.memory_space<vmem>>, vector<8x32xf32>
    tpu.vector_store %arg11[%c32, %c0_21], %38 {strides = array<i32>} : memref<64x32xf32, #tpu.memory_space<vmem>>, vector<8x32xf32>,
    %40 = vector.extract_strided_slice %12 {offsets = [40, 0], sizes = [8, 32], strides = [1, 1]} : vector<64x32xf32> to vector<8x32xf32>
    %cst_22 = arith.constant dense<0.000000e+00> : vector<8x32xf32>
    %41 = tpu.matmul %38, %14, %cst_22 {dimension_numbers = #tpu.dot_dimension_numbers<[1], [0], [0], [1], [0, 0, 1, 1], [], []>} : vector<8x32xf32>, vector<32x32xf32>, vector<8x32xf32> -> vector<8x32xf32>
    %42 = arith.addf %40, %41 : vector<8x32xf32>
    %43 = math.tanh %42 : vector<8x32xf32>
    %c40 = arith.constant 40 : index
    %c0_23 = arith.constant 0 : index
    %44 = vector.load %arg11[%c40, %c0_23] : memref<64x32xf32, #tpu.memory_space<vmem>>, vector<8x32xf32>
    tpu.vector_store %arg11[%c40, %c0_23], %43 {strides = array<i32>} : memref<64x32xf32, #tpu.memory_space<vmem>>, vector<8x32xf32>,
    %45 = vector.extract_strided_slice %12 {offsets = [48, 0], sizes = [8, 32], strides = [1, 1]} : vector<64x32xf32> to vector<8x32xf32>
    %cst_24 = arith.constant dense<0.000000e+00> : vector<8x32xf32>
    %46 = tpu.matmul %43, %14, %cst_24 {dimension_numbers = #tpu.dot_dimension_numbers<[1], [0], [0], [1], [0, 0, 1, 1], [], []>} : vector<8x32xf32>, vector<32x32xf32>, vector<8x32xf32> -> vector<8x32xf32>
    %47 = arith.addf %45, %46 : vector<8x32xf32>
    %48 = math.tanh %47 : vector<8x32xf32>
    %c48 = arith.constant 48 : index
    %c0_25 = arith.constant 0 : index
    %49 = vector.load %arg11[%c48, %c0_25] : memref<64x32xf32, #tpu.memory_space<vmem>>, vector<8x32xf32>
    tpu.vector_store %arg11[%c48, %c0_25], %48 {strides = array<i32>} : memref<64x32xf32, #tpu.memory_space<vmem>>, vector<8x32xf32>,
    %50 = vector.extract_strided_slice %12 {offsets = [56, 0], sizes = [8, 32], strides = [1, 1]} : vector<64x32xf32> to vector<8x32xf32>
    %cst_26 = arith.constant dense<0.000000e+00> : vector<8x32xf32>
    %51 = tpu.matmul %48, %14, %cst_26 {dimension_numbers = #tpu.dot_dimension_numbers<[1], [0], [0], [1], [0, 0, 1, 1], [], []>} : vector<8x32xf32>, vector<32x32xf32>, vector<8x32xf32> -> vector<8x32xf32>
    %52 = arith.addf %50, %51 : vector<8x32xf32>
    %53 = math.tanh %52 : vector<8x32xf32>
    %c56 = arith.constant 56 : index
    %c0_27 = arith.constant 0 : index
    %54 = vector.load %arg11[%c56, %c0_27] : memref<64x32xf32, #tpu.memory_space<vmem>>, vector<8x32xf32>
    tpu.vector_store %arg11[%c56, %c0_27], %53 {strides = array<i32>} : memref<64x32xf32, #tpu.memory_space<vmem>>, vector<8x32xf32>,
    %c0_28 = arith.constant 0 : index
    %c0_29 = arith.constant 0 : index
    %55 = vector.load %arg11[%c0_28, %c0_29] : memref<64x32xf32, #tpu.memory_space<vmem>>, vector<64x32xf32>
    %c0_30 = arith.constant 0 : index
    %c0_31 = arith.constant 0 : index
    %56 = vector.load %arg7[%c0_30, %c0_31] : memref<32x128xf32, #tpu.memory_space<vmem>>, vector<32x128xf32>
    %cst_32 = arith.constant dense<0.000000e+00> : vector<64x128xf32>
    %57 = tpu.matmul %55, %56, %cst_32 {dimension_numbers = #tpu.dot_dimension_numbers<[1], [0], [0], [1], [0, 0, 1, 1], [], []>} : vector<64x32xf32>, vector<32x128xf32>, vector<64x128xf32> -> vector<64x128xf32>
    %c0_33 = arith.constant 0 : index
    %c0_34 = arith.constant 0 : index
    %58 = vector.load %arg8[%c0_33, %c0_34] : memref<1x128xf32, #tpu.memory_space<vmem>>, vector<1x128xf32>
    %59 = vector.broadcast %58 : vector<1x128xf32> to vector<64x128xf32>
    %60 = arith.addf %57, %59 : vector<64x128xf32>
    %c0_35 = arith.constant 0 : index
    %c0_36 = arith.constant 0 : index
    %61 = vector.load %arg9[%c0_35, %c0_36] : memref<64x128xf32, #tpu.memory_space<vmem>>, vector<64x128xf32>
    tpu.vector_store %arg9[%c0_35, %c0_36], %60 {strides = array<i32>} : memref<64x128xf32, #tpu.memory_space<vmem>>, vector<64x128xf32>,
    %c0_37 = arith.constant 0 : index
    %c0_38 = arith.constant 0 : index
    %62 = vector.load %arg10[%c0_37, %c0_38] : memref<8x32xf32, #tpu.memory_space<vmem>>, vector<8x32xf32>
    tpu.vector_store %arg10[%c0_37, %c0_38], %53 {strides = array<i32>} : memref<8x32xf32, #tpu.memory_space<vmem>>, vector<8x32xf32>,
    return
  }
  func.func @transform_0(%arg0: i32) -> (i32, i32) {
    %c0_i32 = arith.constant 0 : i32
    %c0_i32_0 = arith.constant 0 : i32
    %c0_i32_1 = arith.constant 0 : i32
    return %c0_i32, %c0_i32_0 : i32, i32
  }
  func.func @transform_1(%arg0: i32) -> (i32, i32) {
    %c0_i32 = arith.constant 0 : i32
    %c0_i32_0 = arith.constant 0 : i32
    %c0_i32_1 = arith.constant 0 : i32
    return %c0_i32, %c0_i32_0 : i32, i32
  }
  func.func @transform_2(%arg0: i32) -> (i32, i32) {
    %c0_i32 = arith.constant 0 : i32
    %c0_i32_0 = arith.constant 0 : i32
    %c0_i32_1 = arith.constant 0 : i32
    return %c0_i32, %c0_i32_0 : i32, i32
  }
  func.func @transform_3(%arg0: i32) -> (i32, i32) {
    %c0_i32 = arith.constant 0 : i32
    %c0_i32_0 = arith.constant 0 : i32
    %c0_i32_1 = arith.constant 0 : i32
    return %c0_i32, %c0_i32_0 : i32, i32
  }
  func.func @transform_4(%arg0: i32) -> (i32, i32) {
    %c0_i32 = arith.constant 0 : i32
    %c0_i32_0 = arith.constant 0 : i32
    %c0_i32_1 = arith.constant 0 : i32
    return %c0_i32, %c0_i32_0 : i32, i32
  }
  func.func @transform_5(%arg0: i32) -> (i32, i32) {
    %c0_i32 = arith.constant 0 : i32
    %c0_i32_0 = arith.constant 0 : i32
    %c0_i32_1 = arith.constant 0 : i32
    return %c0_i32, %c0_i32_0 : i32, i32
  }
  func.func @transform_6(%arg0: i32) -> (i32, i32) {
    %c0_i32 = arith.constant 0 : i32
    %c0_i32_0 = arith.constant 0 : i32
    %c0_i32_1 = arith.constant 0 : i32
    return %c0_i32, %c0_i32_0 : i32, i32
  }
  func.func @transform_7(%arg0: i32) -> (i32, i32) {
    %c0_i32 = arith.constant 0 : i32
    %c0_i32_0 = arith.constant 0 : i32
    %c0_i32_1 = arith.constant 0 : i32
    return %c0_i32, %c0_i32_0 : i32, i32
  }
  func.func @transform_8(%arg0: i32) -> (i32, i32) {
    %c0_i32 = arith.constant 0 : i32
    %c0_i32_0 = arith.constant 0 : i32
    %c0_i32_1 = arith.constant 0 : i32
    return %c0_i32, %c0_i32_0 : i32, i32
  }
  func.func @transform_9(%arg0: i32) -> (i32, i32) {
    %c0_i32 = arith.constant 0 : i32
    %c0_i32_0 = arith.constant 0 : i32
    %c0_i32_1 = arith.constant 0 : i32
    return %c0_i32, %c0_i32_0 : i32, i32
  }
}

</mosaic_0001>

<llo_original>
// kernel: tpu_custom_call.1
$region0: #{tpu_custom_call.1}
  #allocation0 [shape = 'u32[]', space=smem, size = 0x4, offset = 0x4, fixed_abs, tag = 'smem constant byte address 0x4 - core index']
  #allocation1 [shape = 'u32[144,128]{1,0:T(1,128)}', space=vmem, size = 0x12000, scoped, tag = 'internal scratch']
  #allocation2 [shape = 'f32[64,32]{1,0:T(8,128)}', space=vmem, size = 0x8000, scoped, tag = 'scratch operand']
  %s0 = inlined_call_operand.vmem [shape: s32[64,1], index: 0, kind: input, shape index: {}]
  %s1 = inlined_call_operand.vmem [shape: f32[8,32], index: 1, kind: input, shape index: {}]
  %s2 = inlined_call_operand.vmem [shape: f32[128,32], index: 2, kind: input, shape index: {}]
  %s3 = inlined_call_operand.vmem [shape: f32[1,32], index: 3, kind: input, shape index: {}]
  %s4 = inlined_call_operand.vmem [shape: f32[32,32], index: 4, kind: input, shape index: {}]
  %s5 = inlined_call_operand.vmem [shape: f32[1,32], index: 5, kind: input, shape index: {}]
  %s6 = inlined_call_operand.vmem [shape: f32[32,128], index: 6, kind: input, shape index: {}]
  %s7 = inlined_call_operand.vmem [shape: f32[1,128], index: 7, kind: input, shape index: {}]
  %s8 = inlined_call_operand.hbm [shape: f32[64,128], index: 8, kind: output, shape index: {0}]
  %s9 = inlined_call_operand.hbm [shape: f32[8,32], index: 9, kind: output, shape index: {1}]
  %10 = xla_tuple %s8, %s9
  %s11 = sld [smem:[#allocation0]]
  $region50: #{tpu_custom_call.1} parent=0
    _
  %s13 = ssub.s32 1, %s11
  %s14 = scalar_select 0, %s13, %s11
  $region1: #{tpu_custom_call.1} parent=0
    #allocation3 [shape = 'u8[32768]{0}', space=vmem, size = 0x8000, scoped, tag = 'output window, operand 0, single buffered']
    #allocation4 [shape = 's32[1]{0}', space=sflag, size = 0x4, scoped, tag = 'scoped memory for tpu_custom_call.1']
    #allocation5 [shape = 'u8[4096]{0}', space=vmem, size = 0x1000, scoped, tag = 'output window, operand 1, single buffered']
    #allocation6 [shape = 's32[1]{0}', space=sflag, size = 0x4, scoped, tag = 'scoped memory for tpu_custom_call.1']
    %15 = vsyncpa [#allocation4], 0
    %16 = vsyncpa [#allocation6], 0
    // Predicated region
    $region2: #{tpu_custom_call.1} parent=1 // pred_check
      _
    $region3: #{tpu_custom_call.1} parent=1 // pred_check_branch
      %18 = sbr.rel (0) target = $region5
    $region4: #{tpu_custom_call.1} parent=1 // pred_region
      _
    $region5: #{tpu_custom_call.1} parent=1 // pred_fallthru
      _
    // Predicated region
    $region6: #{tpu_custom_call.1} parent=1 // pred_check
      _
    $region7: #{tpu_custom_call.1} parent=1 // pred_check_branch
      %20 = sbr.rel (0) target = $region9
    $region8: #{tpu_custom_call.1} parent=1 // pred_region
      _
    $region9: #{tpu_custom_call.1} parent=1 // pred_fallthru
      _
    // Predicated region
    $region10: #{tpu_custom_call.1} parent=1 // pred_check
      _
    $region11: #{tpu_custom_call.1} parent=1 // pred_check_branch
      %22 = sbr.rel (0) target = $region13
    $region12: #{tpu_custom_call.1} parent=1 // pred_region
      _
    $region13: #{tpu_custom_call.1} parent=1 // pred_fallthru
      _
    // Predicated region
    $region14: #{tpu_custom_call.1} parent=1 // pred_check
      _
    $region15: #{tpu_custom_call.1} parent=1 // pred_check_branch
      %24 = sbr.rel (0) target = $region17
    $region16: #{tpu_custom_call.1} parent=1 // pred_region
      _
    $region17: #{tpu_custom_call.1} parent=1 // pred_fallthru
      _
    // Predicated region
    $region18: #{tpu_custom_call.1} parent=1 // pred_check
      _
    $region19: #{tpu_custom_call.1} parent=1 // pred_check_branch
      %26 = sbr.rel (0) target = $region21
    $region20: #{tpu_custom_call.1} parent=1 // pred_region
      _
    $region21: #{tpu_custom_call.1} parent=1 // pred_fallthru
      _
    // Predicated region
    $region22: #{tpu_custom_call.1} parent=1 // pred_check
      _
    $region23: #{tpu_custom_call.1} parent=1 // pred_check_branch
      %28 = sbr.rel (0) target = $region25
    $region24: #{tpu_custom_call.1} parent=1 // pred_region
      _
    $region25: #{tpu_custom_call.1} parent=1 // pred_fallthru
      _
    // Predicated region
    $region26: #{tpu_custom_call.1} parent=1 // pred_check
      _
    $region27: #{tpu_custom_call.1} parent=1 // pred_check_branch
      %30 = sbr.rel (0) target = $region29
    $region28: #{tpu_custom_call.1} parent=1 // pred_region
      _
    $region29: #{tpu_custom_call.1} parent=1 // pred_fallthru
      _
    // Predicated region
    $region30: #{tpu_custom_call.1} parent=1 // pred_check
      _
    $region31: #{tpu_custom_call.1} parent=1 // pred_check_branch
      %32 = sbr.rel (0) target = $region33
    $region32: #{tpu_custom_call.1} parent=1 // pred_region
      _
    $region33: #{tpu_custom_call.1} parent=1 // pred_fallthru
      _
    %v33 = vld [vmem:[%s0] sm:$0xff]
    %v34 = vld [vmem:[%s0 + $0x8] sm:$0xff]
    %v35 = vld [vmem:[%s0 + $0x10] sm:$0xff]
    %v36 = vld [vmem:[%s0 + $0x18] sm:$0xff]
    %v37 = vld [vmem:[%s0 + $0x20] sm:$0xff]
    %v38 = vld [vmem:[%s0 + $0x28] sm:$0xff]
    %v39 = vld [vmem:[%s0 + $0x30] sm:$0xff]
    %v40 = vld [vmem:[%s0 + $0x38] sm:$0xff]
    %v41 = vlaneseq
    %v42 = vand.u32 %v41, 127
    %43 = vset.pattern.permute.xlu0 0
    %44 = vperm.xlu0 %43, %v33
    %v45 = vpop.permute.xlu0 %44
    %46 = vset.pattern.permute.xlu0 0
    %47 = vperm.xlu0 %46, %v34
    %v48 = vpop.permute.xlu0 %47
    %49 = vset.pattern.permute.xlu0 0
    %50 = vperm.xlu0 %49, %v35
    %v51 = vpop.permute.xlu0 %50
    %52 = vset.pattern.permute.xlu0 0
    %53 = vperm.xlu0 %52, %v36
    %v54 = vpop.permute.xlu0 %53
    %55 = vset.pattern.permute.xlu0 0
    %56 = vperm.xlu0 %55, %v37
    %v57 = vpop.permute.xlu0 %56
    %58 = vset.pattern.permute.xlu0 0
    %59 = vperm.xlu0 %58, %v38
    %v60 = vpop.permute.xlu0 %59
    %61 = vset.pattern.permute.xlu0 0
    %62 = vperm.xlu0 %61, %v39
    %v63 = vpop.permute.xlu0 %62
    %64 = vset.pattern.permute.xlu0 0
    %65 = vperm.xlu0 %64, %v40
    %v66 = vpop.permute.xlu0 %65
    %vm67 = vcmp.eq.s32.totalorder %v42, %v45
    %vm68 = vcmp.eq.s32.totalorder %v42, %v48
    %vm69 = vcmp.eq.s32.totalorder %v42, %v51
    %vm70 = vcmp.eq.s32.totalorder %v42, %v54
    %vm71 = vcmp.eq.s32.totalorder %v42, %v57
    %vm72 = vcmp.eq.s32.totalorder %v42, %v60
    %vm73 = vcmp.eq.s32.totalorder %v42, %v63
    %vm74 = vcmp.eq.s32.totalorder %v42, %v66
    %v75 = vsel %vm67, 1, 0
    %v76 = vsel %vm68, 1, 0
    %v77 = vsel %vm69, 1, 0
    %v78 = vsel %vm70, 1, 0
    %v79 = vsel %vm71, 1, 0
    %v80 = vsel %vm72, 1, 0
    %v81 = vsel %vm73, 1, 0
    %v82 = vsel %vm74, 1, 0
    %v83 = vcvt.s32.f32 %v75
    %v84 = vcvt.s32.f32 %v76
    %v85 = vcvt.s32.f32 %v77
    %v86 = vcvt.s32.f32 %v78
    %v87 = vcvt.s32.f32 %v79
    %v88 = vcvt.s32.f32 %v80
    %v89 = vcvt.s32.f32 %v81
    %v90 = vcvt.s32.f32 %v82
    %v91 = vld [vmem:[%s3] sm:$0x1]
    %v92 = vld [vmem:[%s5] sm:$0x1]
    %v93 = vadd.f32 %v91, %v92
    %v94 = vld [vmem:[%s2] sm:$0xff]
    %v95 = vld [vmem:[%s2 + $0x8] sm:$0xff]
    %v96 = vld [vmem:[%s2 + $0x10] sm:$0xff]
    %v97 = vld [vmem:[%s2 + $0x18] sm:$0xff]
    %v98 = vld [vmem:[%s2 + $0x20] sm:$0xff]
    %v99 = vld [vmem:[%s2 + $0x28] sm:$0xff]
    %v100 = vld [vmem:[%s2 + $0x30] sm:$0xff]
    %v101 = vld [vmem:[%s2 + $0x38] sm:$0xff]
    %v102 = vld [vmem:[%s2 + $0x40] sm:$0xff]
    %v103 = vld [vmem:[%s2 + $0x48] sm:$0xff]
    %v104 = vld [vmem:[%s2 + $0x50] sm:$0xff]
    %v105 = vld [vmem:[%s2 + $0x58] sm:$0xff]
    %v106 = vld [vmem:[%s2 + $0x60] sm:$0xff]
    %v107 = vld [vmem:[%s2 + $0x68] sm:$0xff]
    %v108 = vld [vmem:[%s2 + $0x70] sm:$0xff]
    %v109 = vld [vmem:[%s2 + $0x78] sm:$0xff]
    %v111 = vlaneseq
    %v112 = vshrl.u32 %v111, 7
    %v113 = vsub.s32 0, %v112
    %v114 = vrot.slane %v93, %v113
    %116 = vmatprep.subr.mxu0 0.0
    %117 = vmatpush1.msra.mxu0 %v109
    %118 = vmatprep.subr.mxu0 0.0
    %119 = vmatpush1.msra.mxu0 %v108
    %120 = vmatprep.subr.mxu0 0.0
    %121 = vmatpush1.msra.mxu0 %v107
    %122 = vmatprep.subr.mxu0 0.0
    %123 = vmatpush1.msra.mxu0 %v106
    %124 = vmatprep.subr.mxu0 0.0
    %125 = vmatpush1.msra.mxu0 %v105
    %126 = vmatprep.subr.mxu0 0.0
    %127 = vmatpush1.msra.mxu0 %v104
    %128 = vmatprep.subr.mxu0 0.0
    %129 = vmatpush1.msra.mxu0 %v103
    %130 = vmatprep.subr.mxu0 0.0
    %131 = vmatpush1.msra.mxu0 %v102
    %132 = vmatprep.subr.mxu0 0.0
    %133 = vmatpush1.msra.mxu0 %v101
    %134 = vmatprep.subr.mxu0 0.0
    %135 = vmatpush1.msra.mxu0 %v100
    %136 = vmatprep.subr.mxu0 0.0
    %137 = vmatpush1.msra.mxu0 %v99
    %138 = vmatprep.subr.mxu0 0.0
    %139 = vmatpush1.msra.mxu0 %v98
    %140 = vmatprep.subr.mxu0 0.0
    %141 = vmatpush1.msra.mxu0 %v97
    %142 = vmatprep.subr.mxu0 0.0
    %143 = vmatpush1.msra.mxu0 %v96
    %144 = vmatprep.subr.mxu0 0.0
    %145 = vmatpush1.msra.mxu0 %v95
    %146 = vmatprep.subr.mxu0 0.0
    %147 = vmatpush1.msra.mxu0 %v94
    %148 = vmatprep.subr.mxu0 0.0
    %149 = vmatpush2.msra.mxu0 0.0
    %150 = vmatprep.subr.mxu0 0.0
    %151 = vmatpush2.msra.mxu0 0.0
    %152 = vmatprep.subr.mxu0 0.0
    %153 = vmatpush2.msra.mxu0 0.0
    %154 = vmatprep.subr.mxu0 0.0
    %155 = vmatpush2.msra.mxu0 0.0
    %156 = vmatprep.subr.mxu0 0.0
    %157 = vmatpush2.msra.mxu0 0.0
    %158 = vmatprep.subr.mxu0 0.0
    %159 = vmatpush2.msra.mxu0 0.0
    %160 = vmatprep.subr.mxu0 0.0
    %161 = vmatpush2.msra.mxu0 0.0
    %162 = vmatprep.subr.mxu0 0.0
    %163 = vmatpush2.msra.mxu0 0.0
    %164 = vmatprep.subr.mxu0 0.0
    %165 = vmatpush2.msra.mxu0 0.0
    %166 = vmatprep.subr.mxu0 0.0
    %167 = vmatpush2.msra.mxu0 0.0
    %168 = vmatprep.subr.mxu0 0.0
    %169 = vmatpush2.msra.mxu0 0.0
    %170 = vmatprep.subr.mxu0 0.0
    %171 = vmatpush2.msra.mxu0 0.0
    %172 = vmatprep.subr.mxu0 0.0
    %173 = vmatpush2.msra.mxu0 0.0
    %174 = vmatprep.subr.mxu0 0.0
    %175 = vmatpush2.msra.mxu0 0.0
    %176 = vmatprep.subr.mxu0 0.0
    %177 = vmatpush2.msra.mxu0 0.0
    %178 = vmatprep.subr.mxu0 0.0
    %179 = vmatpush2.msra.mxu0 0.0
    %180 = vmatprep.mubr.f32.mxu0 0.0
    %181 = vmatmul.mubr.f32.gmra.mxu0 %v83
    %v182 = vpop.f32.mrf.mxu0
    %v183 = vadd.f32 %v114, %v182
    %v184 = vpop.f32.mrf.mxu0
    %185 = vmatprep.mubr.f32.mxu0 0.0
    %186 = vmatmul.mubr.f32.gmra.mxu0 %v84
    %v187 = vpop.f32.mrf.mxu0
    %v188 = vadd.f32 %v114, %v187
    %v189 = vpop.f32.mrf.mxu0
    %190 = vmatprep.mubr.f32.mxu0 0.0
    %191 = vmatmul.mubr.f32.gmra.mxu0 %v85
    %v192 = vpop.f32.mrf.mxu0
    %v193 = vadd.f32 %v114, %v192
    %v194 = vpop.f32.mrf.mxu0
    %195 = vmatprep.mubr.f32.mxu0 0.0
    %196 = vmatmul.mubr.f32.gmra.mxu0 %v86
    %v197 = vpop.f32.mrf.mxu0
    %v198 = vadd.f32 %v114, %v197
    %v199 = vpop.f32.mrf.mxu0
    %200 = vmatprep.mubr.f32.mxu0 0.0
    %201 = vmatmul.mubr.f32.gmra.mxu0 %v87
    %v202 = vpop.f32.mrf.mxu0
    %v203 = vadd.f32 %v114, %v202
    %v204 = vpop.f32.mrf.mxu0
    %205 = vmatprep.mubr.f32.mxu0 0.0
    %206 = vmatmul.mubr.f32.gmra.mxu0 %v88
    %v207 = vpop.f32.mrf.mxu0
    %v208 = vadd.f32 %v114, %v207
    %v209 = vpop.f32.mrf.mxu0
    %210 = vmatprep.mubr.f32.mxu0 0.0
    %211 = vmatmul.mubr.f32.gmra.mxu0 %v89
    %v212 = vpop.f32.mrf.mxu0
    %v213 = vadd.f32 %v114, %v212
    %v214 = vpop.f32.mrf.mxu0
    %215 = vmatprep.mubr.f32.mxu0 0.0
    %216 = vmatmul.mubr.f32.gmra.mxu0 %v90
    %v217 = vpop.f32.mrf.mxu0
    %v218 = vadd.f32 %v114, %v217
    %v219 = vpop.f32.mrf.mxu0
    %220 = vdwg.mxu0
    %v221 = vld [vmem:[%s1] sm:$0xff]
    %v222 = vld [vmem:[%s4] sm:$0xff]
    %v223 = vld [vmem:[%s4 + $0x8] sm:$0xff]
    %v224 = vld [vmem:[%s4 + $0x10] sm:$0xff]
    %v225 = vld [vmem:[%s4 + $0x18] sm:$0xff]
    %vm226 = vcmask 261120
    %v228 = vsel %vm226, %v221, 0
    %230 = vmatprep.subr.mxu0 0.0
    %231 = vmatpush1.msra.mxu0 0.0
    %232 = vmatprep.subr.mxu0 0.0
    %233 = vmatpush1.msra.mxu0 0.0
    %234 = vmatprep.subr.mxu0 0.0
    %235 = vmatpush1.msra.mxu0 0.0
    %236 = vmatprep.subr.mxu0 0.0
    %237 = vmatpush1.msra.mxu0 0.0
    %238 = vmatprep.subr.mxu0 0.0
    %239 = vmatpush1.msra.mxu0 0.0
    %240 = vmatprep.subr.mxu0 0.0
    %241 = vmatpush1.msra.mxu0 0.0
    %242 = vmatprep.subr.mxu0 0.0
    %243 = vmatpush1.msra.mxu0 0.0
    %244 = vmatprep.subr.mxu0 0.0
    %245 = vmatpush1.msra.mxu0 0.0
    %246 = vmatprep.subr.mxu0 0.0
    %247 = vmatpush1.msra.mxu0 0.0
    %248 = vmatprep.subr.mxu0 0.0
    %249 = vmatpush1.msra.mxu0 0.0
    %250 = vmatprep.subr.mxu0 0.0
    %251 = vmatpush1.msra.mxu0 0.0
    %252 = vmatprep.subr.mxu0 0.0
    %253 = vmatpush1.msra.mxu0 0.0
    %254 = vmatprep.subr.mxu0 0.0
    %255 = vmatpush1.msra.mxu0 %v225
    %256 = vmatprep.subr.mxu0 0.0
    %257 = vmatpush1.msra.mxu0 %v224
    %258 = vmatprep.subr.mxu0 0.0
    %259 = vmatpush1.msra.mxu0 %v223
    %260 = vmatprep.subr.mxu0 0.0
    %261 = vmatpush1.msra.mxu0 %v222
    %262 = vmatprep.subr.mxu0 0.0
    %263 = vmatpush2.msra.mxu0 0.0
    %264 = vmatprep.subr.mxu0 0.0
    %265 = vmatpush2.msra.mxu0 0.0
    %266 = vmatprep.subr.mxu0 0.0
    %267 = vmatpush2.msra.mxu0 0.0
    %268 = vmatprep.subr.mxu0 0.0
    %269 = vmatpush2.msra.mxu0 0.0
    %270 = vmatprep.subr.mxu0 0.0
    %271 = vmatpush2.msra.mxu0 0.0
    %272 = vmatprep.subr.mxu0 0.0
    %273 = vmatpush2.msra.mxu0 0.0
    %274 = vmatprep.subr.mxu0 0.0
    %275 = vmatpush2.msra.mxu0 0.0
    %276 = vmatprep.subr.mxu0 0.0
    %277 = vmatpush2.msra.mxu0 0.0
    %278 = vmatprep.subr.mxu0 0.0
    %279 = vmatpush2.msra.mxu0 0.0
    %280 = vmatprep.subr.mxu0 0.0
    %281 = vmatpush2.msra.mxu0 0.0
    %282 = vmatprep.subr.mxu0 0.0
    %283 = vmatpush2.msra.mxu0 0.0
    %284 = vmatprep.subr.mxu0 0.0
    %285 = vmatpush2.msra.mxu0 0.0
    %286 = vmatprep.subr.mxu0 0.0
    %287 = vmatpush2.msra.mxu0 0.0
    %288 = vmatprep.subr.mxu0 0.0
    %289 = vmatpush2.msra.mxu0 0.0
    %290 = vmatprep.subr.mxu0 0.0
    %291 = vmatpush2.msra.mxu0 0.0
    %292 = vmatprep.subr.mxu0 0.0
    %293 = vmatpush2.msra.mxu0 0.0
    %294 = vmatprep.mubr.f32.mxu0 0.0
    %295 = vmatmul.mubr.f32.gmra.mxu0 %v228
    %v296 = vpop.f32.mrf.mxu0
    %v297 = vadd.f32 0.0, %v296
    %v298 = vpop.f32.mrf.mxu0
    %299 = vdwg.mxu0
    %v300 = vadd.f32 %v183, %v297
    %v301 = vtanh.pop %v300
    %302 = vst.msk [vmem:[#allocation2] sm:$0xff] %vm226, %v301
    %v304 = vsel %vm226, %v301, 0
    %306 = vmatprep.subr.mxu0 0.0
    %307 = vmatpush1.msra.mxu0 0.0
    %308 = vmatprep.subr.mxu0 0.0
    %309 = vmatpush1.msra.mxu0 0.0
    %310 = vmatprep.subr.mxu0 0.0
    %311 = vmatpush1.msra.mxu0 0.0
    %312 = vmatprep.subr.mxu0 0.0
    %313 = vmatpush1.msra.mxu0 0.0
    %314 = vmatprep.subr.mxu0 0.0
    %315 = vmatpush1.msra.mxu0 0.0
    %316 = vmatprep.subr.mxu0 0.0
    %317 = vmatpush1.msra.mxu0 0.0
    %318 = vmatprep.subr.mxu0 0.0
    %319 = vmatpush1.msra.mxu0 0.0
    %320 = vmatprep.subr.mxu0 0.0
    %321 = vmatpush1.msra.mxu0 0.0
    %322 = vmatprep.subr.mxu0 0.0
    %323 = vmatpush1.msra.mxu0 0.0
    %324 = vmatprep.subr.mxu0 0.0
    %325 = vmatpush1.msra.mxu0 0.0
    %326 = vmatprep.subr.mxu0 0.0
    %327 = vmatpush1.msra.mxu0 0.0
    %328 = vmatprep.subr.mxu0 0.0
    %329 = vmatpush1.msra.mxu0 0.0
    %330 = vmatprep.subr.mxu0 0.0
    %331 = vmatpush1.msra.mxu0 %v225
    %332 = vmatprep.subr.mxu0 0.0
    %333 = vmatpush1.msra.mxu0 %v224
    %334 = vmatprep.subr.mxu0 0.0
    %335 = vmatpush1.msra.mxu0 %v223
    %336 = vmatprep.subr.mxu0 0.0
    %337 = vmatpush1.msra.mxu0 %v222
    %338 = vmatprep.subr.mxu0 0.0
    %339 = vmatpush2.msra.mxu0 0.0
    %340 = vmatprep.subr.mxu0 0.0
    %341 = vmatpush2.msra.mxu0 0.0
    %342 = vmatprep.subr.mxu0 0.0
    %343 = vmatpush2.msra.mxu0 0.0
    %344 = vmatprep.subr.mxu0 0.0
    %345 = vmatpush2.msra.mxu0 0.0
    %346 = vmatprep.subr.mxu0 0.0
    %347 = vmatpush2.msra.mxu0 0.0
    %348 = vmatprep.subr.mxu0 0.0
    %349 = vmatpush2.msra.mxu0 0.0
    %350 = vmatprep.subr.mxu0 0.0
    %351 = vmatpush2.msra.mxu0 0.0
    %352 = vmatprep.subr.mxu0 0.0
    %353 = vmatpush2.msra.mxu0 0.0
    %354 = vmatprep.subr.mxu0 0.0
    %355 = vmatpush2.msra.mxu0 0.0
    %356 = vmatprep.subr.mxu0 0.0
    %357 = vmatpush2.msra.mxu0 0.0
    %358 = vmatprep.subr.mxu0 0.0
    %359 = vmatpush2.msra.mxu0 0.0
    %360 = vmatprep.subr.mxu0 0.0
    %361 = vmatpush2.msra.mxu0 0.0
    %362 = vmatprep.subr.mxu0 0.0
    %363 = vmatpush2.msra.mxu0 0.0
    %364 = vmatprep.subr.mxu0 0.0
    %365 = vmatpush2.msra.mxu0 0.0
    %366 = vmatprep.subr.mxu0 0.0
    %367 = vmatpush2.msra.mxu0 0.0
    %368 = vmatprep.subr.mxu0 0.0
    %369 = vmatpush2.msra.mxu0 0.0
    %370 = vmatprep.mubr.f32.mxu0 0.0
    %371 = vmatmul.mubr.f32.gmra.mxu0 %v304
    %v372 = vpop.f32.mrf.mxu0
    %v373 = vadd.f32 0.0, %v372
    %v374 = vpop.f32.mrf.mxu0
    %375 = vdwg.mxu0
    %v376 = vadd.f32 %v188, %v373
    %v377 = vtanh.pop %v376
    %378 = vst.msk [vmem:[#allocation2 + $0x8] sm:$0xff] %vm226, %v377
    %v380 = vsel %vm226, %v377, 0
    %382 = vmatprep.subr.mxu0 0.0
    %383 = vmatpush1.msra.mxu0 0.0
    %384 = vmatprep.subr.mxu0 0.0
    %385 = vmatpush1.msra.mxu0 0.0
    %386 = vmatprep.subr.mxu0 0.0
    %387 = vmatpush1.msra.mxu0 0.0
    %388 = vmatprep.subr.mxu0 0.0
    %389 = vmatpush1.msra.mxu0 0.0
    %390 = vmatprep.subr.mxu0 0.0
    %391 = vmatpush1.msra.mxu0 0.0
    %392 = vmatprep.subr.mxu0 0.0
    %393 = vmatpush1.msra.mxu0 0.0
    %394 = vmatprep.subr.mxu0 0.0
    %395 = vmatpush1.msra.mxu0 0.0
    %396 = vmatprep.subr.mxu0 0.0
    %397 = vmatpush1.msra.mxu0 0.0
    %398 = vmatprep.subr.mxu0 0.0
    %399 = vmatpush1.msra.mxu0 0.0
    %400 = vmatprep.subr.mxu0 0.0
    %401 = vmatpush1.msra.mxu0 0.0
    %402 = vmatprep.subr.mxu0 0.0
    %403 = vmatpush1.msra.mxu0 0.0
    %404 = vmatprep.subr.mxu0 0.0
    %405 = vmatpush1.msra.mxu0 0.0
    %406 = vmatprep.subr.mxu0 0.0
    %407 = vmatpush1.msra.mxu0 %v225
    %408 = vmatprep.subr.mxu0 0.0
    %409 = vmatpush1.msra.mxu0 %v224
    %410 = vmatprep.subr.mxu0 0.0
    %411 = vmatpush1.msra.mxu0 %v223
    %412 = vmatprep.subr.mxu0 0.0
    %413 = vmatpush1.msra.mxu0 %v222
    %414 = vmatprep.subr.mxu0 0.0
    %415 = vmatpush2.msra.mxu0 0.0
    %416 = vmatprep.subr.mxu0 0.0
    %417 = vmatpush2.msra.mxu0 0.0
    %418 = vmatprep.subr.mxu0 0.0
    %419 = vmatpush2.msra.mxu0 0.0
    %420 = vmatprep.subr.mxu0 0.0
    %421 = vmatpush2.msra.mxu0 0.0
    %422 = vmatprep.subr.mxu0 0.0
    %423 = vmatpush2.msra.mxu0 0.0
    %424 = vmatprep.subr.mxu0 0.0
    %425 = vmatpush2.msra.mxu0 0.0
    %426 = vmatprep.subr.mxu0 0.0
    %427 = vmatpush2.msra.mxu0 0.0
    %428 = vmatprep.subr.mxu0 0.0
    %429 = vmatpush2.msra.mxu0 0.0
    %430 = vmatprep.subr.mxu0 0.0
    %431 = vmatpush2.msra.mxu0 0.0
    %432 = vmatprep.subr.mxu0 0.0
    %433 = vmatpush2.msra.mxu0 0.0
    %434 = vmatprep.subr.mxu0 0.0
    %435 = vmatpush2.msra.mxu0 0.0
    %436 = vmatprep.subr.mxu0 0.0
    %437 = vmatpush2.msra.mxu0 0.0
    %438 = vmatprep.subr.mxu0 0.0
    %439 = vmatpush2.msra.mxu0 0.0
    %440 = vmatprep.subr.mxu0 0.0
    %441 = vmatpush2.msra.mxu0 0.0
    %442 = vmatprep.subr.mxu0 0.0
    %443 = vmatpush2.msra.mxu0 0.0
    %444 = vmatprep.subr.mxu0 0.0
    %445 = vmatpush2.msra.mxu0 0.0
    %446 = vmatprep.mubr.f32.mxu0 0.0
    %447 = vmatmul.mubr.f32.gmra.mxu0 %v380
    %v448 = vpop.f32.mrf.mxu0
    %v449 = vadd.f32 0.0, %v448
    %v450 = vpop.f32.mrf.mxu0
    %451 = vdwg.mxu0
    %v452 = vadd.f32 %v193, %v449
    %v453 = vtanh.pop %v452
    %454 = vst.msk [vmem:[#allocation2 + $0x10] sm:$0xff] %vm226, %v453
    %v456 = vsel %vm226, %v453, 0
    %458 = vmatprep.subr.mxu0 0.0
    %459 = vmatpush1.msra.mxu0 0.0
    %460 = vmatprep.subr.mxu0 0.0
    %461 = vmatpush1.msra.mxu0 0.0
    %462 = vmatprep.subr.mxu0 0.0
    %463 = vmatpush1.msra.mxu0 0.0
    %464 = vmatprep.subr.mxu0 0.0
    %465 = vmatpush1.msra.mxu0 0.0
    %466 = vmatprep.subr.mxu0 0.0
    %467 = vmatpush1.msra.mxu0 0.0
    %468 = vmatprep.subr.mxu0 0.0
    %469 = vmatpush1.msra.mxu0 0.0
    %470 = vmatprep.subr.mxu0 0.0
    %471 = vmatpush1.msra.mxu0 0.0
    %472 = vmatprep.subr.mxu0 0.0
    %473 = vmatpush1.msra.mxu0 0.0
    %474 = vmatprep.subr.mxu0 0.0
    %475 = vmatpush1.msra.mxu0 0.0
    %476 = vmatprep.subr.mxu0 0.0
    %477 = vmatpush1.msra.mxu0 0.0
    %478 = vmatprep.subr.mxu0 0.0
    %479 = vmatpush1.msra.mxu0 0.0
    %480 = vmatprep.subr.mxu0 0.0
    %481 = vmatpush1.msra.mxu0 0.0
    %482 = vmatprep.subr.mxu0 0.0
    %483 = vmatpush1.msra.mxu0 %v225
    %484 = vmatprep.subr.mxu0 0.0
    %485 = vmatpush1.msra.mxu0 %v224
    %486 = vmatprep.subr.mxu0 0.0
    %487 = vmatpush1.msra.mxu0 %v223
    %488 = vmatprep.subr.mxu0 0.0
    %489 = vmatpush1.msra.mxu0 %v222
    %490 = vmatprep.subr.mxu0 0.0
    %491 = vmatpush2.msra.mxu0 0.0
    %492 = vmatprep.subr.mxu0 0.0
    %493 = vmatpush2.msra.mxu0 0.0
    %494 = vmatprep.subr.mxu0 0.0
    %495 = vmatpush2.msra.mxu0 0.0
    %496 = vmatprep.subr.mxu0 0.0
    %497 = vmatpush2.msra.mxu0 0.0
    %498 = vmatprep.subr.mxu0 0.0
    %499 = vmatpush2.msra.mxu0 0.0
    %500 = vmatprep.subr.mxu0 0.0
    %501 = vmatpush2.msra.mxu0 0.0
    %502 = vmatprep.subr.mxu0 0.0
    %503 = vmatpush2.msra.mxu0 0.0
    %504 = vmatprep.subr.mxu0 0.0
    %505 = vmatpush2.msra.mxu0 0.0
    %506 = vmatprep.subr.mxu0 0.0
    %507 = vmatpush2.msra.mxu0 0.0
    %508 = vmatprep.subr.mxu0 0.0
    %509 = vmatpush2.msra.mxu0 0.0
    %510 = vmatprep.subr.mxu0 0.0
    %511 = vmatpush2.msra.mxu0 0.0
    %512 = vmatprep.subr.mxu0 0.0
    %513 = vmatpush2.msra.mxu0 0.0
    %514 = vmatprep.subr.mxu0 0.0
    %515 = vmatpush2.msra.mxu0 0.0
    %516 = vmatprep.subr.mxu0 0.0
    %517 = vmatpush2.msra.mxu0 0.0
    %518 = vmatprep.subr.mxu0 0.0
    %519 = vmatpush2.msra.mxu0 0.0
    %520 = vmatprep.subr.mxu0 0.0
    %521 = vmatpush2.msra.mxu0 0.0
    %522 = vmatprep.mubr.f32.mxu0 0.0
    %523 = vmatmul.mubr.f32.gmra.mxu0 %v456
    %v524 = vpop.f32.mrf.mxu0
    %v525 = vadd.f32 0.0, %v524
    %v526 = vpop.f32.mrf.mxu0
    %527 = vdwg.mxu0
    %v528 = vadd.f32 %v198, %v525
    %v529 = vtanh.pop %v528
    %530 = vst.msk [vmem:[#allocation2 + $0x18] sm:$0xff] %vm226, %v529
    %v532 = vsel %vm226, %v529, 0
    %534 = vmatprep.subr.mxu0 0.0
    %535 = vmatpush1.msra.mxu0 0.0
    %536 = vmatprep.subr.mxu0 0.0
    %537 = vmatpush1.msra.mxu0 0.0
    %538 = vmatprep.subr.mxu0 0.0
    %539 = vmatpush1.msra.mxu0 0.0
    %540 = vmatprep.subr.mxu0 0.0
    %541 = vmatpush1.msra.mxu0 0.0
    %542 = vmatprep.subr.mxu0 0.0
    %543 = vmatpush1.msra.mxu0 0.0
    %544 = vmatprep.subr.mxu0 0.0
    %545 = vmatpush1.msra.mxu0 0.0
    %546 = vmatprep.subr.mxu0 0.0
    %547 = vmatpush1.msra.mxu0 0.0
    %548 = vmatprep.subr.mxu0 0.0
    %549 = vmatpush1.msra.mxu0 0.0
    %550 = vmatprep.subr.mxu0 0.0
    %551 = vmatpush1.msra.mxu0 0.0
    %552 = vmatprep.subr.mxu0 0.0
    %553 = vmatpush1.msra.mxu0 0.0
    %554 = vmatprep.subr.mxu0 0.0
    %555 = vmatpush1.msra.mxu0 0.0
    %556 = vmatprep.subr.mxu0 0.0
    %557 = vmatpush1.msra.mxu0 0.0
    %558 = vmatprep.subr.mxu0 0.0
    %559 = vmatpush1.msra.mxu0 %v225
    %560 = vmatprep.subr.mxu0 0.0
    %561 = vmatpush1.msra.mxu0 %v224
    %562 = vmatprep.subr.mxu0 0.0
    %563 = vmatpush1.msra.mxu0 %v223
    %564 = vmatprep.subr.mxu0 0.0
    %565 = vmatpush1.msra.mxu0 %v222
    %566 = vmatprep.subr.mxu0 0.0
    %567 = vmatpush2.msra.mxu0 0.0
    %568 = vmatprep.subr.mxu0 0.0
    %569 = vmatpush2.msra.mxu0 0.0
    %570 = vmatprep.subr.mxu0 0.0
    %571 = vmatpush2.msra.mxu0 0.0
    %572 = vmatprep.subr.mxu0 0.0
    %573 = vmatpush2.msra.mxu0 0.0
    %574 = vmatprep.subr.mxu0 0.0
    %575 = vmatpush2.msra.mxu0 0.0
    %576 = vmatprep.subr.mxu0 0.0
    %577 = vmatpush2.msra.mxu0 0.0
    %578 = vmatprep.subr.mxu0 0.0
    %579 = vmatpush2.msra.mxu0 0.0
    %580 = vmatprep.subr.mxu0 0.0
    %581 = vmatpush2.msra.mxu0 0.0
    %582 = vmatprep.subr.mxu0 0.0
    %583 = vmatpush2.msra.mxu0 0.0
    %584 = vmatprep.subr.mxu0 0.0
    %585 = vmatpush2.msra.mxu0 0.0
    %586 = vmatprep.subr.mxu0 0.0
    %587 = vmatpush2.msra.mxu0 0.0
    %588 = vmatprep.subr.mxu0 0.0
    %589 = vmatpush2.msra.mxu0 0.0
    %590 = vmatprep.subr.mxu0 0.0
    %591 = vmatpush2.msra.mxu0 0.0
    %592 = vmatprep.subr.mxu0 0.0
    %593 = vmatpush2.msra.mxu0 0.0
    %594 = vmatprep.subr.mxu0 0.0
    %595 = vmatpush2.msra.mxu0 0.0
    %596 = vmatprep.subr.mxu0 0.0
    %597 = vmatpush2.msra.mxu0 0.0
    %598 = vmatprep.mubr.f32.mxu0 0.0
    %599 = vmatmul.mubr.f32.gmra.mxu0 %v532
    %v600 = vpop.f32.mrf.mxu0
    %v601 = vadd.f32 0.0, %v600
    %v602 = vpop.f32.mrf.mxu0
    %603 = vdwg.mxu0
    %v604 = vadd.f32 %v203, %v601
    %v605 = vtanh.pop %v604
    %606 = vst.msk [vmem:[#allocation2 + $0x20] sm:$0xff] %vm226, %v605
    %v608 = vsel %vm226, %v605, 0
    %610 = vmatprep.subr.mxu0 0.0
    %611 = vmatpush1.msra.mxu0 0.0
    %612 = vmatprep.subr.mxu0 0.0
    %613 = vmatpush1.msra.mxu0 0.0
    %614 = vmatprep.subr.mxu0 0.0
    %615 = vmatpush1.msra.mxu0 0.0
    %616 = vmatprep.subr.mxu0 0.0
    %617 = vmatpush1.msra.mxu0 0.0
    %618 = vmatprep.subr.mxu0 0.0
    %619 = vmatpush1.msra.mxu0 0.0
    %620 = vmatprep.subr.mxu0 0.0
    %621 = vmatpush1.msra.mxu0 0.0
    %622 = vmatprep.subr.mxu0 0.0
    %623 = vmatpush1.msra.mxu0 0.0
    %624 = vmatprep.subr.mxu0 0.0
    %625 = vmatpush1.msra.mxu0 0.0
    %626 = vmatprep.subr.mxu0 0.0
    %627 = vmatpush1.msra.mxu0 0.0
    %628 = vmatprep.subr.mxu0 0.0
    %629 = vmatpush1.msra.mxu0 0.0
    %630 = vmatprep.subr.mxu0 0.0
    %631 = vmatpush1.msra.mxu0 0.0
    %632 = vmatprep.subr.mxu0 0.0
    %633 = vmatpush1.msra.mxu0 0.0
    %634 = vmatprep.subr.mxu0 0.0
    %635 = vmatpush1.msra.mxu0 %v225
    %636 = vmatprep.subr.mxu0 0.0
    %637 = vmatpush1.msra.mxu0 %v224
    %638 = vmatprep.subr.mxu0 0.0
    %639 = vmatpush1.msra.mxu0 %v223
    %640 = vmatprep.subr.mxu0 0.0
    %641 = vmatpush1.msra.mxu0 %v222
    %642 = vmatprep.subr.mxu0 0.0
    %643 = vmatpush2.msra.mxu0 0.0
    %644 = vmatprep.subr.mxu0 0.0
    %645 = vmatpush2.msra.mxu0 0.0
    %646 = vmatprep.subr.mxu0 0.0
    %647 = vmatpush2.msra.mxu0 0.0
    %648 = vmatprep.subr.mxu0 0.0
    %649 = vmatpush2.msra.mxu0 0.0
    %650 = vmatprep.subr.mxu0 0.0
    %651 = vmatpush2.msra.mxu0 0.0
    %652 = vmatprep.subr.mxu0 0.0
    %653 = vmatpush2.msra.mxu0 0.0
    %654 = vmatprep.subr.mxu0 0.0
    %655 = vmatpush2.msra.mxu0 0.0
    %656 = vmatprep.subr.mxu0 0.0
    %657 = vmatpush2.msra.mxu0 0.0
    %658 = vmatprep.subr.mxu0 0.0
    %659 = vmatpush2.msra.mxu0 0.0
    %660 = vmatprep.subr.mxu0 0.0
    %661 = vmatpush2.msra.mxu0 0.0
    %662 = vmatprep.subr.mxu0 0.0
    %663 = vmatpush2.msra.mxu0 0.0
    %664 = vmatprep.subr.mxu0 0.0
    %665 = vmatpush2.msra.mxu0 0.0
    %666 = vmatprep.subr.mxu0 0.0
    %667 = vmatpush2.msra.mxu0 0.0
    %668 = vmatprep.subr.mxu0 0.0
    %669 = vmatpush2.msra.mxu0 0.0
    %670 = vmatprep.subr.mxu0 0.0
    %671 = vmatpush2.msra.mxu0 0.0
    %672 = vmatprep.subr.mxu0 0.0
    %673 = vmatpush2.msra.mxu0 0.0
    %674 = vmatprep.mubr.f32.mxu0 0.0
    %675 = vmatmul.mubr.f32.gmra.mxu0 %v608
    %v676 = vpop.f32.mrf.mxu0
    %v677 = vadd.f32 0.0, %v676
    %v678 = vpop.f32.mrf.mxu0
    %679 = vdwg.mxu0
    %v680 = vadd.f32 %v208, %v677
    %v681 = vtanh.pop %v680
    %682 = vst.msk [vmem:[#allocation2 + $0x28] sm:$0xff] %vm226, %v681
    %v684 = vsel %vm226, %v681, 0
    %686 = vmatprep.subr.mxu0 0.0
    %687 = vmatpush1.msra.mxu0 0.0
    %688 = vmatprep.subr.mxu0 0.0
    %689 = vmatpush1.msra.mxu0 0.0
    %690 = vmatprep.subr.mxu0 0.0
    %691 = vmatpush1.msra.mxu0 0.0
    %692 = vmatprep.subr.mxu0 0.0
    %693 = vmatpush1.msra.mxu0 0.0
    %694 = vmatprep.subr.mxu0 0.0
    %695 = vmatpush1.msra.mxu0 0.0
    %696 = vmatprep.subr.mxu0 0.0
    %697 = vmatpush1.msra.mxu0 0.0
    %698 = vmatprep.subr.mxu0 0.0
    %699 = vmatpush1.msra.mxu0 0.0
    %700 = vmatprep.subr.mxu0 0.0
    %701 = vmatpush1.msra.mxu0 0.0
    %702 = vmatprep.subr.mxu0 0.0
    %703 = vmatpush1.msra.mxu0 0.0
    %704 = vmatprep.subr.mxu0 0.0
    %705 = vmatpush1.msra.mxu0 0.0
    %706 = vmatprep.subr.mxu0 0.0
    %707 = vmatpush1.msra.mxu0 0.0
    %708 = vmatprep.subr.mxu0 0.0
    %709 = vmatpush1.msra.mxu0 0.0
    %710 = vmatprep.subr.mxu0 0.0
    %711 = vmatpush1.msra.mxu0 %v225
    %712 = vmatprep.subr.mxu0 0.0
    %713 = vmatpush1.msra.mxu0 %v224
    %714 = vmatprep.subr.mxu0 0.0
    %715 = vmatpush1.msra.mxu0 %v223
    %716 = vmatprep.subr.mxu0 0.0
    %717 = vmatpush1.msra.mxu0 %v222
    %718 = vmatprep.subr.mxu0 0.0
    %719 = vmatpush2.msra.mxu0 0.0
    %720 = vmatprep.subr.mxu0 0.0
    %721 = vmatpush2.msra.mxu0 0.0
    %722 = vmatprep.subr.mxu0 0.0
    %723 = vmatpush2.msra.mxu0 0.0
    %724 = vmatprep.subr.mxu0 0.0
    %725 = vmatpush2.msra.mxu0 0.0
    %726 = vmatprep.subr.mxu0 0.0
    %727 = vmatpush2.msra.mxu0 0.0
    %728 = vmatprep.subr.mxu0 0.0
    %729 = vmatpush2.msra.mxu0 0.0
    %730 = vmatprep.subr.mxu0 0.0
    %731 = vmatpush2.msra.mxu0 0.0
    %732 = vmatprep.subr.mxu0 0.0
    %733 = vmatpush2.msra.mxu0 0.0
    %734 = vmatprep.subr.mxu0 0.0
    %735 = vmatpush2.msra.mxu0 0.0
    %736 = vmatprep.subr.mxu0 0.0
    %737 = vmatpush2.msra.mxu0 0.0
    %738 = vmatprep.subr.mxu0 0.0
    %739 = vmatpush2.msra.mxu0 0.0
    %740 = vmatprep.subr.mxu0 0.0
    %741 = vmatpush2.msra.mxu0 0.0
    %742 = vmatprep.subr.mxu0 0.0
    %743 = vmatpush2.msra.mxu0 0.0
    %744 = vmatprep.subr.mxu0 0.0
    %745 = vmatpush2.msra.mxu0 0.0
    %746 = vmatprep.subr.mxu0 0.0
    %747 = vmatpush2.msra.mxu0 0.0
    %748 = vmatprep.subr.mxu0 0.0
    %749 = vmatpush2.msra.mxu0 0.0
    %750 = vmatprep.mubr.f32.mxu0 0.0
    %751 = vmatmul.mubr.f32.gmra.mxu0 %v684
    %v752 = vpop.f32.mrf.mxu0
    %v753 = vadd.f32 0.0, %v752
    %v754 = vpop.f32.mrf.mxu0
    %755 = vdwg.mxu0
    %v756 = vadd.f32 %v213, %v753
    %v757 = vtanh.pop %v756
    %758 = vst.msk [vmem:[#allocation2 + $0x30] sm:$0xff] %vm226, %v757
    %v760 = vsel %vm226, %v757, 0
    %762 = vmatprep.subr.mxu0 0.0
    %763 = vmatpush1.msra.mxu0 0.0
    %764 = vmatprep.subr.mxu0 0.0
    %765 = vmatpush1.msra.mxu0 0.0
    %766 = vmatprep.subr.mxu0 0.0
    %767 = vmatpush1.msra.mxu0 0.0
    %768 = vmatprep.subr.mxu0 0.0
    %769 = vmatpush1.msra.mxu0 0.0
    %770 = vmatprep.subr.mxu0 0.0
    %771 = vmatpush1.msra.mxu0 0.0
    %772 = vmatprep.subr.mxu0 0.0
    %773 = vmatpush1.msra.mxu0 0.0
    %774 = vmatprep.subr.mxu0 0.0
    %775 = vmatpush1.msra.mxu0 0.0
    %776 = vmatprep.subr.mxu0 0.0
    %777 = vmatpush1.msra.mxu0 0.0
    %778 = vmatprep.subr.mxu0 0.0
    %779 = vmatpush1.msra.mxu0 0.0
    %780 = vmatprep.subr.mxu0 0.0
    %781 = vmatpush1.msra.mxu0 0.0
    %782 = vmatprep.subr.mxu0 0.0
    %783 = vmatpush1.msra.mxu0 0.0
    %784 = vmatprep.subr.mxu0 0.0
    %785 = vmatpush1.msra.mxu0 0.0
    %786 = vmatprep.subr.mxu0 0.0
    %787 = vmatpush1.msra.mxu0 %v225
    %788 = vmatprep.subr.mxu0 0.0
    %789 = vmatpush1.msra.mxu0 %v224
    %790 = vmatprep.subr.mxu0 0.0
    %791 = vmatpush1.msra.mxu0 %v223
    %792 = vmatprep.subr.mxu0 0.0
    %793 = vmatpush1.msra.mxu0 %v222
    %794 = vmatprep.subr.mxu0 0.0
    %795 = vmatpush2.msra.mxu0 0.0
    %796 = vmatprep.subr.mxu0 0.0
    %797 = vmatpush2.msra.mxu0 0.0
    %798 = vmatprep.subr.mxu0 0.0
    %799 = vmatpush2.msra.mxu0 0.0
    %800 = vmatprep.subr.mxu0 0.0
    %801 = vmatpush2.msra.mxu0 0.0
    %802 = vmatprep.subr.mxu0 0.0
    %803 = vmatpush2.msra.mxu0 0.0
    %804 = vmatprep.subr.mxu0 0.0
    %805 = vmatpush2.msra.mxu0 0.0
    %806 = vmatprep.subr.mxu0 0.0
    %807 = vmatpush2.msra.mxu0 0.0
    %808 = vmatprep.subr.mxu0 0.0
    %809 = vmatpush2.msra.mxu0 0.0
    %810 = vmatprep.subr.mxu0 0.0
    %811 = vmatpush2.msra.mxu0 0.0
    %812 = vmatprep.subr.mxu0 0.0
    %813 = vmatpush2.msra.mxu0 0.0
    %814 = vmatprep.subr.mxu0 0.0
    %815 = vmatpush2.msra.mxu0 0.0
    %816 = vmatprep.subr.mxu0 0.0
    %817 = vmatpush2.msra.mxu0 0.0
    %818 = vmatprep.subr.mxu0 0.0
    %819 = vmatpush2.msra.mxu0 0.0
    %820 = vmatprep.subr.mxu0 0.0
    %821 = vmatpush2.msra.mxu0 0.0
    %822 = vmatprep.subr.mxu0 0.0
    %823 = vmatpush2.msra.mxu0 0.0
    %824 = vmatprep.subr.mxu0 0.0
    %825 = vmatpush2.msra.mxu0 0.0
    %826 = vmatprep.mubr.f32.mxu0 0.0
    %827 = vmatmul.mubr.f32.gmra.mxu0 %v760
    %v828 = vpop.f32.mrf.mxu0
    %v829 = vadd.f32 0.0, %v828
    %v830 = vpop.f32.mrf.mxu0
    %831 = vdwg.mxu0
    %v832 = vadd.f32 %v218, %v829
    %v833 = vtanh.pop %v832
    %834 = vst.msk [vmem:[#allocation2 + $0x38] sm:$0xff] %vm226, %v833
    %v835 = vld [vmem:[#allocation2] sm:$0xff]
    %v836 = vld [vmem:[#allocation2 + $0x8] sm:$0xff]
    %v837 = vld [vmem:[#allocation2 + $0x10] sm:$0xff]
    %v838 = vld [vmem:[#allocation2 + $0x18] sm:$0xff]
    %v839 = vld [vmem:[#allocation2 + $0x20] sm:$0xff]
    %v840 = vld [vmem:[#allocation2 + $0x28] sm:$0xff]
    %v841 = vld [vmem:[#allocation2 + $0x30] sm:$0xff]
    %v842 = vld [vmem:[#allocation2 + $0x38] sm:$0xff]
    %v843 = vld [vmem:[%s6] sm:$0xff]
    %v844 = vld [vmem:[%s6 + $0x8] sm:$0xff]
    %v845 = vld [vmem:[%s6 + $0x10] sm:$0xff]
    %v846 = vld [vmem:[%s6 + $0x18] sm:$0xff]
    %v847 = vld [vmem:[%s7] sm:$0x1]
    %v849 = vlaneseq
    %v850 = vshrl.u32 %v849, 7
    %v851 = vsub.s32 0, %v850
    %v852 = vrot.slane %v847, %v851
    %v855 = vsel %vm226, %v835, 0
    %v858 = vsel %vm226, %v836, 0
    %v861 = vsel %vm226, %v837, 0
    %v864 = vsel %vm226, %v838, 0
    %v867 = vsel %vm226, %v839, 0
    %v870 = vsel %vm226, %v840, 0
    %v873 = vsel %vm226, %v841, 0
    %v876 = vsel %vm226, %v842, 0
    %878 = vmatprep.subr.mxu0 0.0
    %879 = vmatpush1.msra.mxu0 0.0
    %880 = vmatprep.subr.mxu0 0.0
    %881 = vmatpush1.msra.mxu0 0.0
    %882 = vmatprep.subr.mxu0 0.0
    %883 = vmatpush1.msra.mxu0 0.0
    %884 = vmatprep.subr.mxu0 0.0
    %885 = vmatpush1.msra.mxu0 0.0
    %886 = vmatprep.subr.mxu0 0.0
    %887 = vmatpush1.msra.mxu0 0.0
    %888 = vmatprep.subr.mxu0 0.0
    %889 = vmatpush1.msra.mxu0 0.0
    %890 = vmatprep.subr.mxu0 0.0
    %891 = vmatpush1.msra.mxu0 0.0
    %892 = vmatprep.subr.mxu0 0.0
    %893 = vmatpush1.msra.mxu0 0.0
    %894 = vmatprep.subr.mxu0 0.0
    %895 = vmatpush1.msra.mxu0 0.0
    %896 = vmatprep.subr.mxu0 0.0
    %897 = vmatpush1.msra.mxu0 0.0
    %898 = vmatprep.subr.mxu0 0.0
    %899 = vmatpush1.msra.mxu0 0.0
    %900 = vmatprep.subr.mxu0 0.0
    %901 = vmatpush1.msra.mxu0 0.0
    %902 = vmatprep.subr.mxu0 0.0
    %903 = vmatpush1.msra.mxu0 %v846
    %904 = vmatprep.subr.mxu0 0.0
    %905 = vmatpush1.msra.mxu0 %v845
    %906 = vmatprep.subr.mxu0 0.0
    %907 = vmatpush1.msra.mxu0 %v844
    %908 = vmatprep.subr.mxu0 0.0
    %909 = vmatpush1.msra.mxu0 %v843
    %910 = vmatprep.subr.mxu0 0.0
    %911 = vmatpush2.msra.mxu0 0.0
    %912 = vmatprep.subr.mxu0 0.0
    %913 = vmatpush2.msra.mxu0 0.0
    %914 = vmatprep.subr.mxu0 0.0
    %915 = vmatpush2.msra.mxu0 0.0
    %916 = vmatprep.subr.mxu0 0.0
    %917 = vmatpush2.msra.mxu0 0.0
    %918 = vmatprep.subr.mxu0 0.0
    %919 = vmatpush2.msra.mxu0 0.0
    %920 = vmatprep.subr.mxu0 0.0
    %921 = vmatpush2.msra.mxu0 0.0
    %922 = vmatprep.subr.mxu0 0.0
    %923 = vmatpush2.msra.mxu0 0.0
    %924 = vmatprep.subr.mxu0 0.0
    %925 = vmatpush2.msra.mxu0 0.0
    %926 = vmatprep.subr.mxu0 0.0
    %927 = vmatpush2.msra.mxu0 0.0
    %928 = vmatprep.subr.mxu0 0.0
    %929 = vmatpush2.msra.mxu0 0.0
    %930 = vmatprep.subr.mxu0 0.0
    %931 = vmatpush2.msra.mxu0 0.0
    %932 = vmatprep.subr.mxu0 0.0
    %933 = vmatpush2.msra.mxu0 0.0
    %934 = vmatprep.subr.mxu0 0.0
    %935 = vmatpush2.msra.mxu0 0.0
    %936 = vmatprep.subr.mxu0 0.0
    %937 = vmatpush2.msra.mxu0 0.0
    %938 = vmatprep.subr.mxu0 0.0
    %939 = vmatpush2.msra.mxu0 0.0
    %940 = vmatprep.subr.mxu0 0.0
    %941 = vmatpush2.msra.mxu0 0.0
    %942 = vmatprep.mubr.f32.mxu0 0.0
    %943 = vmatmul.mubr.f32.gmra.mxu0 %v855
    %v944 = vpop.f32.mrf.mxu0
    %v945 = vadd.f32 %v852, %v944
    %v946 = vpop.f32.mrf.mxu0
    %947 = vmatprep.mubr.f32.mxu0 0.0
    %948 = vmatmul.mubr.f32.gmra.mxu0 %v858
    %v949 = vpop.f32.mrf.mxu0
    %v950 = vadd.f32 %v852, %v949
    %v951 = vpop.f32.mrf.mxu0
    %952 = vmatprep.mubr.f32.mxu0 0.0
    %953 = vmatmul.mubr.f32.gmra.mxu0 %v861
    %v954 = vpop.f32.mrf.mxu0
    %v955 = vadd.f32 %v852, %v954
    %v956 = vpop.f32.mrf.mxu0
    %957 = vmatprep.mubr.f32.mxu0 0.0
    %958 = vmatmul.mubr.f32.gmra.mxu0 %v864
    %v959 = vpop.f32.mrf.mxu0
    %v960 = vadd.f32 %v852, %v959
    %v961 = vpop.f32.mrf.mxu0
    %962 = vmatprep.mubr.f32.mxu0 0.0
    %963 = vmatmul.mubr.f32.gmra.mxu0 %v867
    %v964 = vpop.f32.mrf.mxu0
    %v965 = vadd.f32 %v852, %v964
    %v966 = vpop.f32.mrf.mxu0
    %967 = vmatprep.mubr.f32.mxu0 0.0
    %968 = vmatmul.mubr.f32.gmra.mxu0 %v870
    %v969 = vpop.f32.mrf.mxu0
    %v970 = vadd.f32 %v852, %v969
    %v971 = vpop.f32.mrf.mxu0
    %972 = vmatprep.mubr.f32.mxu0 0.0
    %973 = vmatmul.mubr.f32.gmra.mxu0 %v873
    %v974 = vpop.f32.mrf.mxu0
    %v975 = vadd.f32 %v852, %v974
    %v976 = vpop.f32.mrf.mxu0
    %977 = vmatprep.mubr.f32.mxu0 0.0
    %978 = vmatmul.mubr.f32.gmra.mxu0 %v876
    %v979 = vpop.f32.mrf.mxu0
    %v980 = vadd.f32 %v852, %v979
    %v981 = vpop.f32.mrf.mxu0
    %982 = vdwg.mxu0
    %983 = vst [vmem:[#allocation3] sm:$0xff] %v945
    %984 = vst [vmem:[#allocation3 + $0x8] sm:$0xff] %v950
    %985 = vst [vmem:[#allocation3 + $0x10] sm:$0xff] %v955
    %986 = vst [vmem:[#allocation3 + $0x18] sm:$0xff] %v960
    %987 = vst [vmem:[#allocation3 + $0x20] sm:$0xff] %v965
    %988 = vst [vmem:[#allocation3 + $0x28] sm:$0xff] %v970
    %989 = vst [vmem:[#allocation3 + $0x30] sm:$0xff] %v975
    %990 = vst [vmem:[#allocation3 + $0x38] sm:$0xff] %v980
    %991 = vst.msk [vmem:[#allocation5] sm:$0xff] %vm226, %v833
    // Predicated region
    $region34: #{tpu_custom_call.1} parent=1 // pred_check
      _
    $region35: #{tpu_custom_call.1} parent=1 // pred_check_branch
      %993 = sbr.rel (0) target = $region37
    $region36: #{tpu_custom_call.1} parent=1 // pred_region
      %s995 = ssub.s32 1024, 1024
      %996 = vsyncadd [#allocation4], %s995
      %s997 = sshll.u32 [#allocation3], 4
      %s998 = int_to_ptr.vmem [resolvable:$true] %s997
      %1003 = dma.vmem_to_hbm [thread:$0]  %s998, 1024, %s8, [#allocation4], 128, 128, 8
    $region37: #{tpu_custom_call.1} parent=1 // pred_fallthru
      _
    // Predicated region
    $region38: #{tpu_custom_call.1} parent=1 // pred_check
      _
    $region39: #{tpu_custom_call.1} parent=1 // pred_check_branch
      %1005 = sbr.rel (0) target = $region41
    $region40: #{tpu_custom_call.1} parent=1 // pred_region
      %s1007 = ssub.s32 128, 128
      %1008 = vsyncadd [#allocation6], %s1007
      %s1010 = sshll.u32 [#allocation5], 4
      %s1011 = int_to_ptr.vmem [resolvable:$true] %s1010
      %1013 = dma.vmem_to_hbm [thread:$0]  %s1011, 128, %s9, [#allocation6]
    $region41: #{tpu_custom_call.1} parent=1 // pred_fallthru
      _
    // Predicated region
    $region42: #{tpu_custom_call.1} parent=1 // pred_check
      _
    $region43: #{tpu_custom_call.1} parent=1 // pred_check_branch
      %1015 = sbr.rel (0) target = $region45
    $region44: #{tpu_custom_call.1} parent=1 // pred_region
      %1016 = dma.done [#allocation4], 1024
    $region45: #{tpu_custom_call.1} parent=1 // pred_fallthru
      _
    // Predicated region
    $region46: #{tpu_custom_call.1} parent=1 // pred_check
      _
    $region47: #{tpu_custom_call.1} parent=1 // pred_check_branch
      %1018 = sbr.rel (0) target = $region49
    $region48: #{tpu_custom_call.1} parent=1 // pred_region
      %1019 = dma.done [#allocation6], 128
    $region49: #{tpu_custom_call.1} parent=1 // pred_fallthru
      _
    %1020 = vsyncpa [#allocation4], 1
    %1021 = vsyncpa [#allocation6], 1

</llo_original>
